<compile_context>
chip_gen: v7x
topology: tpu7x:2x2x1
jax: 0.10.0
libtpu: 0.0.40
codegen_flags: <defaults>
</compile_context>

<pallas_src>
import jax
import jax.numpy as jnp
from jax.experimental import pallas as pl
from jax.experimental.pallas import tpu as pltpu


LAYERS = [1, 20, 20, 1]
HPAD = 24          # hidden width 20 padded up to a whole number of sublane groups


def _round_up(x, m):
    return ((x + m - 1) // m) * m


def _choose_tiling(n, tm_max=8192):
    """Pad batch to a multiple of 128 lanes and pick a lane tile size.

    tm is a multiple of 128 that divides n_pad (no padding beyond
    round_up(n, 128)); largest such tile <= tm_max, keeping >= 2 grid steps
    whenever there are >= 2 lane blocks (so the v7x megacore stays fed).
    """
    n_pad = _round_up(n, 128)
    n_blocks = n_pad // 128
    max_d = max(1, min(n_blocks, tm_max // 128))
    best = 1
    for d in range(1, max_d + 1):
        if n_blocks % d != 0:
            continue
        steps = n_blocks // d
        if n_blocks >= 2 and steps < 2:
            continue  # keep >= 2 "parallel" steps for the 2 v7x TensorCores
        best = d
    return n_pad, 128 * best


def pina_kernel(x_ref, w1_ref, vec_ref, scal_ref, out_ref):
    """PINA forward for one lane tile of the batch (feature-major layout).

    x_ref   : (1, TM)          input times, batch on lanes
    w1_ref  : (HPAD, HPAD)     second-layer weight, pre-scaled by a1, torch (out,in)
    vec_ref : (4, HPAD, 1)     [a0*w0, a0*b0, a1*b1, w2-column] as columns
    scal_ref: (1,)  SMEM       [b2]
    out_ref : (1, TM)
    """
    x = x_ref[...]                                          # (1, TM)
    w0 = vec_ref[0]                                         # (HPAD, 1)  a0 folded in
    b0 = vec_ref[1]                                         # (HPAD, 1)  a0 folded in
    b1 = vec_ref[2]                                         # (HPAD, 1)  a1 folded in
    w2 = vec_ref[3]                                         # (HPAD, 1)
    b2 = scal_ref[0]

    # layer 0: K=1 contraction -> pure VPU broadcast (outer product) + bias,
    # then native EUP tanh (a0 already folded into w0/b0).
    h = jnp.tanh(w0 * x + b0)                               # (HPAD, TM)

    # layer 1: (HPAD,HPAD) @ (HPAD,TM) on the MXU, full-f32 contraction.
    h = jnp.dot(w1_ref[...], h,
                preferred_element_type=jnp.float32,
                precision=jax.lax.Precision.HIGHEST) + b1
    h = jnp.tanh(h)                                         # (HPAD, TM)

    # layer 2: 1-wide output -> VPU multiply + sublane reduce.
    out_ref[...] = jnp.sum(w2 * h, axis=0, keepdims=True) + b2


def pina_forward(t, params, *, tm_max=8192):
    """t: (N, 1) float32.  params in torch layout (see init_params).  Returns (N, 1)."""
    N = t.shape[0]
    n_pad, tm = _choose_tiling(N, tm_max)

    # --- lane-dense input: (N,1) -> (1, N_pad), zero-padded tail lanes ---
    t_lane = jnp.pad(t.reshape(1, N).astype(jnp.float32), ((0, 0), (0, n_pad - N)))

    # --- fold adaptive scales into the tiny weights once, pad to HPAD ---
    h0, h1 = LAYERS[1], LAYERS[2]                           # 20, 20
    a0 = params["a"][0]
    a1 = params["a"][1]
    w1p = jnp.zeros((HPAD, HPAD), jnp.float32).at[:h1, :h0].set(a1 * params["w1"])
    vecs = jnp.zeros((4, HPAD, 1), jnp.float32)
    vecs = vecs.at[0, :h0, 0].set(a0 * params["w0"][:, 0])  # a0 * w0 (column)
    vecs = vecs.at[1, :h0, 0].set(a0 * params["b0"])        # a0 * b0
    vecs = vecs.at[2, :h1, 0].set(a1 * params["b1"])        # a1 * b1
    vecs = vecs.at[3, :h1, 0].set(params["w2"][0, :])       # w2 as a column
    scal = params["b2"].reshape(1).astype(jnp.float32)      # [b2] -> SMEM

    grid = (n_pad // tm,)
    rep2 = lambda i: (0, 0)      # weights replicated across batch tiles
    rep3 = lambda i: (0, 0, 0)

    cost = pl.CostEstimate(
        flops=int(2 * n_pad * (HPAD + HPAD * HPAD + HPAD)),
        transcendentals=int(2 * HPAD * n_pad),
        bytes_accessed=int(4 * (2 * n_pad + HPAD * HPAD + 4 * HPAD + 1)),
    )

    out_lane = pl.pallas_call(
        pina_kernel,
        out_shape=jax.ShapeDtypeStruct((1, n_pad), jnp.float32),
        grid_spec=pltpu.PrefetchScalarGridSpec(
            num_scalar_prefetch=0,
            grid=grid,
            in_specs=[
                pl.BlockSpec((1, tm), lambda i: (0, i)),             # t (lanes)
                pl.BlockSpec((HPAD, HPAD), rep2),                    # w1 (a1 folded)
                pl.BlockSpec((4, HPAD, 1), rep3),                    # packed vectors
                pl.BlockSpec((1,), lambda i: (0,),
                             memory_space=pltpu.MemorySpace.SMEM),   # [b2]
            ],
            out_specs=pl.BlockSpec((1, tm), lambda i: (0, i)),       # lane-dense out
        ),
        compiler_params=pltpu.CompilerParams(
            dimension_semantics=("parallel",),
            vmem_limit_bytes=32 * 1024 * 1024),  # explicit headroom (v5e default is 16 MiB)
        cost_estimate=cost,
    )(t_lane, w1p, vecs, scal)

    return out_lane[0, :N].reshape(N, 1)


def init_params(key, layers):
    """Deterministic init mirroring nn.Linear defaults, torch (out, in) layout."""
    params = {}
    for i in range(len(layers) - 1):
        fan_in, fan_out = layers[i], layers[i + 1]
        key, kw, kb = jax.random.split(key, 3)
        bound = 1.0 / jnp.sqrt(jnp.float32(fan_in))
        params[f"w{i}"] = jax.random.uniform(kw, (fan_out, fan_in), jnp.float32,
                                             minval=-bound, maxval=bound)
        params[f"b{i}"] = jax.random.uniform(kb, (fan_out,), jnp.float32,
                                             minval=-bound, maxval=bound)
    params["a"] = jnp.ones((2,), jnp.float32)   # [a0, a1], both init to 1.0
    return params


def pina_forward_ref(t, params):
    """Pure-JAX reference matching the PyTorch forward semantics."""
    h = t @ params["w0"].T + params["b0"]
    h = jnp.tanh(params["a"][0] * h)
    h = h @ params["w1"].T + params["b1"]
    h = jnp.tanh(params["a"][1] * h)
    return h @ params["w2"].T + params["b2"]


if __name__ == "__main__":
    key = jax.random.PRNGKey(0)
    key, kt = jax.random.split(key)

    N = 200                                            # collocation points (not a
    t = jax.random.uniform(kt, (N, 1), jnp.float32)    # multiple of 128 -> exercises padding)

    params = init_params(key, LAYERS)

    out = pina_forward(t, params)
    out = jax.block_until_ready(out)

    ref = pina_forward_ref(t, params)
    assert out.shape == (N, 1) and out.dtype == jnp.float32
    assert jnp.allclose(out, ref, rtol=1e-5, atol=1e-5)

    print("KERNEL_OK")
</pallas_src>

<mosaic_0001>
module attributes {stable_mosaic.version = 11 : i64} {
  func.func @pina_kernel(%arg0: i32, %arg1: memref<1x128xf32, #tpu.memory_space<vmem>>, %arg2: memref<24x24xf32, #tpu.memory_space<vmem>>, %arg3: memref<4x24x1xf32, #tpu.memory_space<vmem>>, %arg4: memref<1xf32, #tpu.memory_space<smem>>, %arg5: memref<1x128xf32, #tpu.memory_space<vmem>>) attributes {dimension_semantics = [#tpu.dimension_semantics<parallel>], iteration_bounds = array<i64: 2>, scalar_prefetch = 0 : i64, scratch_operands = 0 : i64, tpu.core_type = #tpu.core_type<tc>, window_params = [{transform_indices = @transform_0, window_bounds = array<i64: 1, 128>}, {pipeline_mode = #tpu.pipeline_mode<synchronous>, transform_indices = @transform_1, window_bounds = array<i64: 24, 24>}, {pipeline_mode = #tpu.pipeline_mode<synchronous>, transform_indices = @transform_2, window_bounds = array<i64: 4, 24, 1>}, {transform_indices = @transform_3, window_bounds = array<i64: 1>}, {transform_indices = @transform_4, window_bounds = array<i64: 1, 128>}]} {
    %c0 = arith.constant 0 : index
    %c0_0 = arith.constant 0 : index
    %0 = vector.load %arg1[%c0, %c0_0] : memref<1x128xf32, #tpu.memory_space<vmem>>, vector<1x128xf32>
    %c0_1 = arith.constant 0 : index
    %c0_2 = arith.constant 0 : index
    %c0_3 = arith.constant 0 : index
    %1 = vector.load %arg3[%c0_1, %c0_2, %c0_3] : memref<4x24x1xf32, #tpu.memory_space<vmem>>, vector<1x24x1xf32>
    %2 = vector.shape_cast %1 : vector<1x24x1xf32> to vector<24x1xf32>
    %c1 = arith.constant 1 : index
    %c0_4 = arith.constant 0 : index
    %c0_5 = arith.constant 0 : index
    %3 = vector.load %arg3[%c1, %c0_4, %c0_5] : memref<4x24x1xf32, #tpu.memory_space<vmem>>, vector<1x24x1xf32>
    %4 = vector.shape_cast %3 : vector<1x24x1xf32> to vector<24x1xf32>
    %c2 = arith.constant 2 : index
    %c0_6 = arith.constant 0 : index
    %c0_7 = arith.constant 0 : index
    %5 = vector.load %arg3[%c2, %c0_6, %c0_7] : memref<4x24x1xf32, #tpu.memory_space<vmem>>, vector<1x24x1xf32>
    %6 = vector.shape_cast %5 : vector<1x24x1xf32> to vector<24x1xf32>
    %c3 = arith.constant 3 : index
    %c0_8 = arith.constant 0 : index
    %c0_9 = arith.constant 0 : index
    %7 = vector.load %arg3[%c3, %c0_8, %c0_9] : memref<4x24x1xf32, #tpu.memory_space<vmem>>, vector<1x24x1xf32>
    %8 = vector.shape_cast %7 : vector<1x24x1xf32> to vector<24x1xf32>
    %c0_10 = arith.constant 0 : index
    %9 = memref.load %arg4[%c0_10] : memref<1xf32, #tpu.memory_space<smem>>
    %10 = vector.broadcast %2 : vector<24x1xf32> to vector<24x128xf32>
    %11 = vector.broadcast %0 : vector<1x128xf32> to vector<24x128xf32>
    %12 = arith.mulf %10, %11 : vector<24x128xf32>
    %13 = vector.broadcast %4 : vector<24x1xf32> to vector<24x128xf32>
    %14 = arith.addf %12, %13 : vector<24x128xf32>
    %15 = math.tanh %14 : vector<24x128xf32>
    %c0_11 = arith.constant 0 : index
    %c0_12 = arith.constant 0 : index
    %16 = vector.load %arg2[%c0_11, %c0_12] : memref<24x24xf32, #tpu.memory_space<vmem>>, vector<24x24xf32>
    %cst = arith.constant dense<0.000000e+00> : vector<24x128xf32>
    %17 = tpu.matmul %16, %15, %cst {dimension_numbers = #tpu.dot_dimension_numbers<[1], [0], [0], [1], [0, 0, 1, 1], [], []>, precision = #tpu.contract_precision<fp32>} : vector<24x24xf32>, vector<24x128xf32>, vector<24x128xf32> -> vector<24x128xf32>
    %18 = vector.broadcast %6 : vector<24x1xf32> to vector<24x128xf32>
    %19 = arith.addf %17, %18 : vector<24x128xf32>
    %20 = math.tanh %19 : vector<24x128xf32>
    %21 = vector.broadcast %8 : vector<24x1xf32> to vector<24x128xf32>
    %22 = arith.mulf %21, %20 : vector<24x128xf32>
    %cst_13 = arith.constant dense<0.000000e+00> : vector<128xf32>
    %23 = vector.multi_reduction <add>, %22, %cst_13 [0] : vector<24x128xf32> to vector<128xf32>
    %24 = vector.shape_cast %23 : vector<128xf32> to vector<1x128xf32>
    %25 = vector.broadcast %9 : f32 to vector<1x128xf32>
    %26 = arith.addf %24, %25 : vector<1x128xf32>
    %c0_14 = arith.constant 0 : index
    %c0_15 = arith.constant 0 : index
    %27 = vector.load %arg5[%c0_14, %c0_15] : memref<1x128xf32, #tpu.memory_space<vmem>>, vector<1x128xf32>
    tpu.vector_store %arg5[%c0_14, %c0_15], %26 {strides = array<i32>} : memref<1x128xf32, #tpu.memory_space<vmem>>, vector<1x128xf32>,
    return
  }
  func.func @transform_0(%arg0: i32) -> (i32, i32) {
    %c0_i32 = arith.constant 0 : i32
    %c0_i32_0 = arith.constant 0 : i32
    return %c0_i32, %arg0 : i32, i32
  }
  func.func @transform_1(%arg0: i32) -> (i32, i32) {
    %c0_i32 = arith.constant 0 : i32
    %c0_i32_0 = arith.constant 0 : i32
    %c0_i32_1 = arith.constant 0 : i32
    return %c0_i32, %c0_i32_0 : i32, i32
  }
  func.func @transform_2(%arg0: i32) -> (i32, i32, i32) {
    %c0_i32 = arith.constant 0 : i32
    %c0_i32_0 = arith.constant 0 : i32
    %c0_i32_1 = arith.constant 0 : i32
    %c0_i32_2 = arith.constant 0 : i32
    return %c0_i32, %c0_i32_0, %c0_i32_1 : i32, i32, i32
  }
  func.func @transform_3(%arg0: i32) -> i32 {
    %c0_i32 = arith.constant 0 : i32
    %c0_i32_0 = arith.constant 0 : i32
    return %c0_i32 : i32
  }
  func.func @transform_4(%arg0: i32) -> (i32, i32) {
    %c0_i32 = arith.constant 0 : i32
    %c0_i32_0 = arith.constant 0 : i32
    return %c0_i32, %arg0 : i32, i32
  }
}

</mosaic_0001>

<llo_original>
// kernel: tpu_custom_call.1
$region0: #{tpu_custom_call.1}
  #allocation0 [shape = 'u32[]', space=smem, size = 0x4, offset = 0x4, fixed_abs, tag = 'smem constant byte address 0x4 - core index']
  #allocation1 [shape = 'u32[144,128]{1,0:T(1,128)}', space=vmem, size = 0x12000, scoped, tag = 'internal scratch']
  #allocation2 [shape = 'f32[1]{0:T(128)S(6)}', space=smem, size = 0x200, scoped, tag = 'scoped memory for tpu_custom_call.1']
  %s0 = inlined_call_operand.vmem [shape: f32[1,256], index: 0, kind: input, shape index: {}]
  %s1 = inlined_call_operand.vmem [shape: f32[24,24], index: 1, kind: input, shape index: {}]
  %s2 = inlined_call_operand.vmem [shape: f32[4,24,1], index: 2, kind: input, shape index: {}]
  %s3 = inlined_call_operand.<no memory space> [shape: f32[1], index: 3, kind: input, shape index: {}]
  %s4 = inlined_call_operand.hbm [shape: f32[1,256], index: 4, kind: output, shape index: {}]
  %s5 = sld [smem:[#allocation0]]
  $region49: #{tpu_custom_call.1} parent=0
    _
  %s7 = ssub.s32 1, %s5
  %s8 = scalar_select 0, %s7, %s5
  %9 = sst [smem:[#allocation2]] %s3
  $region1: #{tpu_custom_call.1} parent=0
    #allocation3 [shape = 'u8[1024]{0}', space=vmem, size = 0x400, scoped, tag = 'output window, operand 0']
    #allocation4 [shape = 's32[2]{0}', space=sflag, size = 0x8, scoped, tag = 'scoped memory for tpu_custom_call.1']
    %10 = vsyncpa [#allocation4], 0
    %s11 = scalar_lea.sflag [#allocation4], 1
    %12 = vsyncpa %s11, 0
    loop: start=0, step=1, limit=4
    $region2: #{tpu_custom_call.1} parent=1 // loop_pre_header
      _
    $region3: #{tpu_custom_call.1} parent=1 // loop_header
      %s14 = sphi 0, %s18
      %p15 = scmp.ge.s32.totalorder %s14, 4
      %s24 = sphi 0, %s26
      %s27 = sphi 0, %s24
      %s28 = sphi 0, %s27
      %s44 = sphi 0, %s28
      %s48 = sphi 0, %s48
      %s50 = sphi 0, %s48
      %s51 = sphi 0, %s50
      %s65 = sphi 0, %s51
      %s69 = sphi 0, %s69
      %s71 = sphi 0, %s69
      %s72 = sphi 0, %s71
      %s86 = sphi 0, %s72
      %s90 = sphi 0, %s90
      %s92 = sphi 0, %s90
      %s93 = sphi 0, %s92
      %s107 = sphi 0, %s93
      %s113 = sphi 0, %s115
      %s116 = sphi 0, %s113
      %s117 = sphi 0, %s116
      %s133 = sphi 0, %s117
    $region4: #{tpu_custom_call.1} parent=1 // loop_header_branch
      %17 = sbr.rel (%p15) target = $region8
    $region5: #{tpu_custom_call.1} parent=1 // loop_body
      %s19 = ssub.s32 %s14, 1
      %s20 = ssub.s32 %s14, 2
      %s21 = sadd.s32 %s14, 1
      %s22 = ssub.s32 %s14, %s21
      %p23 = scmp.eq.s32.totalorder %s22, 0
      %s25 = sadd.s32 %s24, 1
      %s26 = scalar_select %p23, %s24, %s25
      %p29 = pneg %p23
      %p30 = scmp.eq.s32.totalorder %s14, 1
      %p31 = por %p29, %p30
      %p32 = scmp.ne.s32.totalorder %s24, %s27
      %p33 = scmp.eq.s32.totalorder %s14, 0
      %p34 = por %p32, %p33
      %p35 = scmp.ne.s32.totalorder %s24, %s27
      %p36 = scmp.eq.s32.totalorder %s19, 1
      %p37 = por %p35, %p36
      %p38 = scmp.ne.s32.totalorder %s27, %s28
      %p39 = scmp.eq.s32.totalorder %s19, 0
      %p40 = por %p38, %p39
      %p41 = scmp.ne.s32.totalorder %s27, %s28
      %p42 = scmp.eq.s32.totalorder %s20, 1
      %p43 = por %p41, %p42
      %p45 = scmp.ne.s32.totalorder %s28, %s44
      %p46 = scmp.eq.s32.totalorder %s20, 0
      %p47 = por %p45, %p46
      %s49 = sadd.s32 %s48, 1
      %p52 = scmp.eq.s32.totalorder %s14, 1
      %p53 = scmp.ne.s32.totalorder %s48, %s50
      %p54 = scmp.eq.s32.totalorder %s14, 0
      %p55 = por %p53, %p54
      %p56 = scmp.ne.s32.totalorder %s48, %s50
      %p57 = scmp.eq.s32.totalorder %s19, 1
      %p58 = por %p56, %p57
      %p59 = scmp.ne.s32.totalorder %s50, %s51
      %p60 = scmp.eq.s32.totalorder %s19, 0
      %p61 = por %p59, %p60
      %p62 = scmp.ne.s32.totalorder %s50, %s51
      %p63 = scmp.eq.s32.totalorder %s20, 1
      %p64 = por %p62, %p63
      %p66 = scmp.ne.s32.totalorder %s51, %s65
      %p67 = scmp.eq.s32.totalorder %s20, 0
      %p68 = por %p66, %p67
      %s70 = sadd.s32 %s69, 1
      %p73 = scmp.eq.s32.totalorder %s14, 1
      %p74 = scmp.ne.s32.totalorder %s69, %s71
      %p75 = scmp.eq.s32.totalorder %s14, 0
      %p76 = por %p74, %p75
      %p77 = scmp.ne.s32.totalorder %s69, %s71
      %p78 = scmp.eq.s32.totalorder %s19, 1
      %p79 = por %p77, %p78
      %p80 = scmp.ne.s32.totalorder %s71, %s72
      %p81 = scmp.eq.s32.totalorder %s19, 0
      %p82 = por %p80, %p81
      %p83 = scmp.ne.s32.totalorder %s71, %s72
      %p84 = scmp.eq.s32.totalorder %s20, 1
      %p85 = por %p83, %p84
      %p87 = scmp.ne.s32.totalorder %s72, %s86
      %p88 = scmp.eq.s32.totalorder %s20, 0
      %p89 = por %p87, %p88
      %s91 = sadd.s32 %s90, 1
      %p94 = scmp.eq.s32.totalorder %s14, 1
      %p95 = scmp.ne.s32.totalorder %s90, %s92
      %p96 = scmp.eq.s32.totalorder %s14, 0
      %p97 = por %p95, %p96
      %p98 = scmp.ne.s32.totalorder %s90, %s92
      %p99 = scmp.eq.s32.totalorder %s19, 1
      %p100 = por %p98, %p99
      %p101 = scmp.ne.s32.totalorder %s92, %s93
      %p102 = scmp.eq.s32.totalorder %s19, 0
      %p103 = por %p101, %p102
      %p104 = scmp.ne.s32.totalorder %s92, %s93
      %p105 = scmp.eq.s32.totalorder %s20, 1
      %p106 = por %p104, %p105
      %p108 = scmp.ne.s32.totalorder %s93, %s107
      %p109 = scmp.eq.s32.totalorder %s20, 0
      %p110 = por %p108, %p109
      %s111 = ssub.s32 %s14, %s21
      %p112 = scmp.eq.s32.totalorder %s111, 0
      %s114 = sadd.s32 %s113, 1
      %s115 = scalar_select %p112, %s113, %s114
      %p118 = pneg %p112
      %p119 = scmp.eq.s32.totalorder %s14, 1
      %p120 = por %p118, %p119
      %p121 = scmp.ne.s32.totalorder %s113, %s116
      %p122 = scmp.eq.s32.totalorder %s14, 0
      %p123 = por %p121, %p122
      %p124 = scmp.ne.s32.totalorder %s113, %s116
      %p125 = scmp.eq.s32.totalorder %s19, 1
      %p126 = por %p124, %p125
      %p127 = scmp.ne.s32.totalorder %s116, %s117
      %p128 = scmp.eq.s32.totalorder %s19, 0
      %p129 = por %p127, %p128
      %p130 = scmp.ne.s32.totalorder %s116, %s117
      %p131 = scmp.eq.s32.totalorder %s20, 1
      %p132 = por %p130, %p131
      %p134 = scmp.ne.s32.totalorder %s117, %s133
      %p135 = scmp.eq.s32.totalorder %s20, 0
      %p136 = por %p134, %p135
      %p137 = scmp.le.s32.totalorder 1, %s14
      %p138 = scmp.lt.s32.totalorder %s14, 3
      %p139 = pnand %p137, %p138
      %p140 = pneg %p139
      // Predicated region
      $region9: #{tpu_custom_call.1} parent=5 // pred_check
        _
      $region10: #{tpu_custom_call.1} parent=5 // pred_check_branch
        %142 = sbr.rel (%p139) target = $region12
      $region11: #{tpu_custom_call.1} parent=5 // pred_region
        %s143 = ssub.s32 %s14, 1
        // Predicated region
        $region13: #{tpu_custom_call.1} parent=11 // pred_check
          %p144 = pneg %p61
        $region14: #{tpu_custom_call.1} parent=11 // pred_check_branch
          %146 = sbr.rel (%p144) target = $region16
        $region15: #{tpu_custom_call.1} parent=11 // pred_region
          _
        $region16: #{tpu_custom_call.1} parent=11 // pred_fallthru
          _
        // Predicated region
        $region17: #{tpu_custom_call.1} parent=11 // pred_check
          %p147 = pneg %p82
        $region18: #{tpu_custom_call.1} parent=11 // pred_check_branch
          %149 = sbr.rel (%p147) target = $region20
        $region19: #{tpu_custom_call.1} parent=11 // pred_region
          _
        $region20: #{tpu_custom_call.1} parent=11 // pred_fallthru
          _
        // Predicated region
        $region21: #{tpu_custom_call.1} parent=11 // pred_check
          %p150 = pneg %p103
        $region22: #{tpu_custom_call.1} parent=11 // pred_check_branch
          %152 = sbr.rel (%p150) target = $region24
        $region23: #{tpu_custom_call.1} parent=11 // pred_region
          _
        $region24: #{tpu_custom_call.1} parent=11 // pred_fallthru
          _
      $region12: #{tpu_custom_call.1} parent=5 // pred_fallthru
        _
      %p153 = scmp.lt.s32.totalorder %s14, 2
      // Predicated region
      $region25: #{tpu_custom_call.1} parent=5 // pred_check
        %p154 = pneg %p153
      $region26: #{tpu_custom_call.1} parent=5 // pred_check_branch
        %156 = sbr.rel (%p154) target = $region28
      $region27: #{tpu_custom_call.1} parent=5 // pred_region
        // Predicated region
        $region29: #{tpu_custom_call.1} parent=27 // pred_check
          %p157 = pneg %p34
        $region30: #{tpu_custom_call.1} parent=27 // pred_check_branch
          %159 = sbr.rel (%p157) target = $region32
        $region31: #{tpu_custom_call.1} parent=27 // pred_region
          %p160 = scmp.lt.s32.totalorder %s14, 1
          %s161 = scalar_select %p160, %s14, 1
          %s162 = scalar_lea.vmem %s0, %s161
        $region32: #{tpu_custom_call.1} parent=27 // pred_fallthru
          _
      $region28: #{tpu_custom_call.1} parent=5 // pred_fallthru
        _
      %p163 = scmp.le.s32.totalorder 1, %s14
      %p164 = scmp.lt.s32.totalorder %s14, 3
      %p165 = pnand %p163, %p164
      %p166 = pneg %p165
      // Predicated region
      $region33: #{tpu_custom_call.1} parent=5 // pred_check
        _
      $region34: #{tpu_custom_call.1} parent=5 // pred_check_branch
        %168 = sbr.rel (%p165) target = $region36
      $region35: #{tpu_custom_call.1} parent=5 // pred_region
        %s169 = ssub.s32 %s14, 1
        %p170 = scmp.lt.s32.totalorder %s19, 1
        %s171 = scalar_select %p170, %s19, 1
        %s172 = scalar_lea.vmem %s0, %s171
        %p173 = pneg %p40
        %p174 = pneg %p37
        %p175 = pneg %p61
        %p176 = pneg %p58
        %p177 = pneg %p82
        %p178 = pneg %p79
        %p179 = pneg %p103
        %p180 = pneg %p100
        %p181 = pneg %p129
        %p182 = pneg %p126
        %s183 = sand.u32 %s116, 1
        %s184 = scalar_lea.sflag [#allocation4], %s183
        %s185 = sand.u32 %s116, 1
        %s186 = scalar_lea.vmem [#allocation3], %s185
        %p187 = scmp.lt.s32.totalorder %s19, 1
        %s188 = scalar_select %p187, %s19, 1
        %s189 = scalar_lea.vmem %s0, %s188
        %v190 = vld [vmem:[%s189] sm:$0x1]
        %v191 = vld [vmem:[%s2] sm:$0xff]
        %v192 = vld [vmem:[%s2 + $0x8] sm:$0xff]
        %v193 = vld [vmem:[%s2 + $0x10] sm:$0xff]
        %s194 = scalar_lea.vmem %s2, 24
        %v195 = vld [vmem:[%s194] sm:$0xff]
        %v196 = vld [vmem:[%s194 + $0x8] sm:$0xff]
        %v197 = vld [vmem:[%s194 + $0x10] sm:$0xff]
        %s198 = scalar_lea.vmem %s2, 48
        %v199 = vld [vmem:[%s198] sm:$0xff]
        %v200 = vld [vmem:[%s198 + $0x8] sm:$0xff]
        %v201 = vld [vmem:[%s198 + $0x10] sm:$0xff]
        %s202 = scalar_lea.vmem %s2, 72
        %v203 = vld [vmem:[%s202] sm:$0xff]
        %v204 = vld [vmem:[%s202 + $0x8] sm:$0xff]
        %v205 = vld [vmem:[%s202 + $0x10] sm:$0xff]
        %s206 = sld [smem:[#allocation2]]
        %208 = vset.pattern.permute.xlu0 0
        %209 = vperm.xlu0 %208, %v191
        %v210 = vpop.permute.xlu0 %209
        %213 = vset.pattern.permute.xlu0 0
        %214 = vperm.xlu0 %213, %v192
        %v215 = vpop.permute.xlu0 %214
        %218 = vset.pattern.permute.xlu0 0
        %219 = vperm.xlu0 %218, %v193
        %v220 = vpop.permute.xlu0 %219
        %v223 = vlaneseq
        %v224 = vshrl.u32 %v223, 7
        %v225 = vsub.s32 0, %v224
        %v226 = vrot.slane %v190, %v225
        %v228 = vmul.f32 %v210, %v226
        %v229 = vmul.f32 %v215, %v226
        %v230 = vmul.f32 %v220, %v226
        %232 = vset.pattern.permute.xlu0 0
        %233 = vperm.xlu0 %232, %v195
        %v234 = vpop.permute.xlu0 %233
        %237 = vset.pattern.permute.xlu0 0
        %238 = vperm.xlu0 %237, %v196
        %v239 = vpop.permute.xlu0 %238
        %242 = vset.pattern.permute.xlu0 0
        %243 = vperm.xlu0 %242, %v197
        %v244 = vpop.permute.xlu0 %243
        %v246 = vadd.f32 %v228, %v234
        %v247 = vadd.f32 %v229, %v239
        %v248 = vadd.f32 %v230, %v244
        %v249 = vtanh.pop %v246
        %v250 = vtanh.pop %v247
        %v251 = vtanh.pop %v248
        %v252 = vld [vmem:[%s1] sm:$0xff]
        %v253 = vld [vmem:[%s1 + $0x8] sm:$0xff]
        %v254 = vld [vmem:[%s1 + $0x10] sm:$0xff]
        %256 = vset.pattern.permute.xlu0 0
        %257 = vperm.xlu0 %256, %v199
        %v258 = vpop.permute.xlu0 %257
        %261 = vset.pattern.permute.xlu0 0
        %262 = vperm.xlu0 %261, %v200
        %v263 = vpop.permute.xlu0 %262
        %266 = vset.pattern.permute.xlu0 0
        %267 = vperm.xlu0 %266, %v201
        %v268 = vpop.permute.xlu0 %267
        %vm270 = vcmask 195584
        %v272 = vsel %vm270, %v252, 0
        %v275 = vsel %vm270, %v253, 0
        %v278 = vsel %vm270, %v254, 0
        %280 = vmatprep.subr.mxu0 0.0
        %v281 = vand.u32 %v249, 4294901760
        %282 = vmatpush1.msra.mxu0 %v281
        %283 = vmatprep.subr.mxu0 0.0
        %v284 = vand.u32 %v250, 4294901760
        %285 = vmatpush1.msra.mxu0 %v284
        %286 = vmatprep.subr.mxu0 0.0
        %v287 = vand.u32 %v251, 4294901760
        %288 = vmatpush1.msra.mxu0 %v287
        %289 = vmatprep.subr.mxu0 0.0
        %290 = vmatpush1.msra.mxu0 0.0
        %291 = vmatprep.subr.mxu0 0.0
        %292 = vmatpush1.msra.mxu0 0.0
        %293 = vmatprep.subr.mxu0 0.0
        %294 = vmatpush1.msra.mxu0 0.0
        %295 = vmatprep.subr.mxu0 0.0
        %296 = vmatpush1.msra.mxu0 0.0
        %297 = vmatprep.subr.mxu0 0.0
        %298 = vmatpush1.msra.mxu0 0.0
        %299 = vmatprep.subr.mxu0 0.0
        %300 = vmatpush1.msra.mxu0 0.0
        %301 = vmatprep.subr.mxu0 0.0
        %302 = vmatpush1.msra.mxu0 0.0
        %303 = vmatprep.subr.mxu0 0.0
        %304 = vmatpush1.msra.mxu0 0.0
        %305 = vmatprep.subr.mxu0 0.0
        %306 = vmatpush1.msra.mxu0 0.0
        %307 = vmatprep.subr.mxu0 0.0
        %308 = vmatpush1.msra.mxu0 0.0
        %309 = vmatprep.subr.mxu0 0.0
        %310 = vmatpush1.msra.mxu0 0.0
        %311 = vmatprep.subr.mxu0 0.0
        %312 = vmatpush1.msra.mxu0 0.0
        %313 = vmatprep.subr.mxu0 0.0
        %314 = vmatpush1.msra.mxu0 0.0
        %315 = vmatprep.subr.mxu0 0.0
        %316 = vmatpush1.msra.mxu0 0.0
        %317 = vmatprep.subr.mxu0 0.0
        %318 = vmatpush1.msra.mxu0 0.0
        %319 = vmatprep.subr.mxu0 0.0
        %320 = vmatpush1.msra.mxu0 0.0
        %321 = vmatprep.subr.mxu0 0.0
        %322 = vmatpush1.msra.mxu0 0.0
        %323 = vmatprep.subr.mxu0 0.0
        %324 = vmatpush1.msra.mxu0 0.0
        %325 = vmatprep.subr.mxu0 0.0
        %326 = vmatpush1.msra.mxu0 0.0
        %327 = vmatprep.subr.mxu0 0.0
        %328 = vmatpush1.msra.mxu0 0.0
        %329 = vmatprep.subr.mxu0 0.0
        %330 = vmatpush1.msra.mxu0 0.0
        %331 = vmatprep.subr.mxu0 0.0
        %332 = vmatpush1.msra.mxu0 0.0
        %333 = vmatprep.subr.mxu0 0.0
        %334 = vmatpush1.msra.mxu0 0.0
        %335 = vmatprep.subr.mxu0 0.0
        %336 = vmatpush1.msra.mxu0 0.0
        %337 = vmatprep.subr.mxu0 0.0
        %338 = vmatpush1.msra.mxu0 0.0
        %339 = vmatprep.subr.mxu0 0.0
        %340 = vmatpush1.msra.mxu0 0.0
        %341 = vmatprep.subr.mxu0 0.0
        %342 = vmatpush1.msra.mxu0 0.0
        %343 = vmatprep.subr.mxu0 0.0
        %344 = vmatpush1.msra.mxu0 0.0
        %345 = vmatprep.subr.mxu0 0.0
        %346 = vmatpush1.msra.mxu0 0.0
        %347 = vmatprep.mubr.f32.mxu0 0.0
        %v348 = vand.u32 %v272, 4294901760
        %v349 = vsub.f32 %v272, %v348
        %v350 = vand.u32 %v349, 4294901760
        %v351 = vsub.f32 %v349, %v350
        %v352 = vand.u32 %v351, 4294901760
        %353 = vmatmul.mubr.f32.gmra.mrb[0].mxu0 %v352
        %v354 = vpop.f32.mrb[0].mxu0
        %v355 = vadd.f32 %v258, %v354
        %v356 = vpop.f32.mrb[0].mxu0
        %357 = vmatprep.mubr.f32.mxu0 0.0
        %v358 = vand.u32 %v275, 4294901760
        %v359 = vsub.f32 %v275, %v358
        %v360 = vand.u32 %v359, 4294901760
        %v361 = vsub.f32 %v359, %v360
        %v362 = vand.u32 %v361, 4294901760
        %363 = vmatmul.mubr.f32.gmra.mrb[0].mxu0 %v362
        %v364 = vpop.f32.mrb[0].mxu0
        %v365 = vadd.f32 %v263, %v364
        %v366 = vpop.f32.mrb[0].mxu0
        %367 = vmatprep.mubr.f32.mxu0 0.0
        %v368 = vand.u32 %v278, 4294901760
        %v369 = vsub.f32 %v278, %v368
        %v370 = vand.u32 %v369, 4294901760
        %v371 = vsub.f32 %v369, %v370
        %v372 = vand.u32 %v371, 4294901760
        %373 = vmatmul.mubr.f32.gmra.mrb[0].mxu0 %v372
        %v374 = vpop.f32.mrb[0].mxu0
        %v375 = vadd.f32 %v268, %v374
        %v376 = vpop.f32.mrb[0].mxu0
        %377 = vdwg.mxu0
        %378 = vmatprep.subr.mxu0 0.0
        %v379 = vand.u32 %v249, 4294901760
        %v380 = vsub.f32 %v249, %v379
        %v381 = vand.u32 %v380, 4294901760
        %v382 = vsub.f32 %v380, %v381
        %v383 = vand.u32 %v382, 4294901760
        %384 = vmatpush1.msra.mxu0 %v383
        %385 = vmatprep.subr.mxu0 0.0
        %v386 = vand.u32 %v250, 4294901760
        %v387 = vsub.f32 %v250, %v386
        %v388 = vand.u32 %v387, 4294901760
        %v389 = vsub.f32 %v387, %v388
        %v390 = vand.u32 %v389, 4294901760
        %391 = vmatpush1.msra.mxu0 %v390
        %392 = vmatprep.subr.mxu0 0.0
        %v393 = vand.u32 %v251, 4294901760
        %v394 = vsub.f32 %v251, %v393
        %v395 = vand.u32 %v394, 4294901760
        %v396 = vsub.f32 %v394, %v395
        %v397 = vand.u32 %v396, 4294901760
        %398 = vmatpush1.msra.mxu0 %v397
        %399 = vmatprep.subr.mxu0 0.0
        %400 = vmatpush1.msra.mxu0 0.0
        %401 = vmatprep.subr.mxu0 0.0
        %402 = vmatpush1.msra.mxu0 0.0
        %403 = vmatprep.subr.mxu0 0.0
        %404 = vmatpush1.msra.mxu0 0.0
        %405 = vmatprep.subr.mxu0 0.0
        %406 = vmatpush1.msra.mxu0 0.0
        %407 = vmatprep.subr.mxu0 0.0
        %408 = vmatpush1.msra.mxu0 0.0
        %409 = vmatprep.subr.mxu0 0.0
        %410 = vmatpush1.msra.mxu0 0.0
        %411 = vmatprep.subr.mxu0 0.0
        %412 = vmatpush1.msra.mxu0 0.0
        %413 = vmatprep.subr.mxu0 0.0
        %414 = vmatpush1.msra.mxu0 0.0
        %415 = vmatprep.subr.mxu0 0.0
        %416 = vmatpush1.msra.mxu0 0.0
        %417 = vmatprep.subr.mxu0 0.0
        %418 = vmatpush1.msra.mxu0 0.0
        %419 = vmatprep.subr.mxu0 0.0
        %420 = vmatpush1.msra.mxu0 0.0
        %421 = vmatprep.subr.mxu0 0.0
        %422 = vmatpush1.msra.mxu0 0.0
        %423 = vmatprep.subr.mxu0 0.0
        %424 = vmatpush1.msra.mxu0 0.0
        %425 = vmatprep.subr.mxu0 0.0
        %426 = vmatpush1.msra.mxu0 0.0
        %427 = vmatprep.subr.mxu0 0.0
        %428 = vmatpush1.msra.mxu0 0.0
        %429 = vmatprep.subr.mxu0 0.0
        %430 = vmatpush1.msra.mxu0 0.0
        %431 = vmatprep.subr.mxu0 0.0
        %432 = vmatpush1.msra.mxu0 0.0
        %433 = vmatprep.subr.mxu0 0.0
        %434 = vmatpush1.msra.mxu0 0.0
        %435 = vmatprep.subr.mxu0 0.0
        %436 = vmatpush1.msra.mxu0 0.0
        %437 = vmatprep.subr.mxu0 0.0
        %438 = vmatpush1.msra.mxu0 0.0
        %439 = vmatprep.subr.mxu0 0.0
        %440 = vmatpush1.msra.mxu0 0.0
        %441 = vmatprep.subr.mxu0 0.0
        %442 = vmatpush1.msra.mxu0 0.0
        %443 = vmatprep.subr.mxu0 0.0
        %444 = vmatpush1.msra.mxu0 0.0
        %445 = vmatprep.subr.mxu0 0.0
        %446 = vmatpush1.msra.mxu0 0.0
        %447 = vmatprep.subr.mxu0 0.0
        %448 = vmatpush1.msra.mxu0 0.0
        %449 = vmatprep.subr.mxu0 0.0
        %450 = vmatpush1.msra.mxu0 0.0
        %451 = vmatprep.subr.mxu0 0.0
        %452 = vmatpush1.msra.mxu0 0.0
        %453 = vmatprep.subr.mxu0 0.0
        %454 = vmatpush1.msra.mxu0 0.0
        %455 = vmatprep.subr.mxu0 0.0
        %456 = vmatpush1.msra.mxu0 0.0
        %457 = vmatprep.mubr.f32.mxu0 0.0
        %v458 = vand.u32 %v272, 4294901760
        %459 = vmatmul.mubr.f32.gmra.mrb[0].mxu0 %v458
        %v460 = vpop.f32.mrb[0].mxu0
        %v461 = vadd.f32 %v355, %v460
        %v462 = vpop.f32.mrb[0].mxu0
        %463 = vmatprep.mubr.f32.mxu0 0.0
        %v464 = vand.u32 %v275, 4294901760
        %465 = vmatmul.mubr.f32.gmra.mrb[0].mxu0 %v464
        %v466 = vpop.f32.mrb[0].mxu0
        %v467 = vadd.f32 %v365, %v466
        %v468 = vpop.f32.mrb[0].mxu0
        %469 = vmatprep.mubr.f32.mxu0 0.0
        %v470 = vand.u32 %v278, 4294901760
        %471 = vmatmul.mubr.f32.gmra.mrb[0].mxu0 %v470
        %v472 = vpop.f32.mrb[0].mxu0
        %v473 = vadd.f32 %v375, %v472
        %v474 = vpop.f32.mrb[0].mxu0
        %475 = vdwg.mxu0
        %476 = vmatprep.subr.mxu0 0.0
        %v477 = vand.u32 %v249, 4294901760
        %v478 = vsub.f32 %v249, %v477
        %479 = vmatpush1.msra.mxu0 %v478
        %480 = vmatprep.subr.mxu0 0.0
        %v481 = vand.u32 %v250, 4294901760
        %v482 = vsub.f32 %v250, %v481
        %483 = vmatpush1.msra.mxu0 %v482
        %484 = vmatprep.subr.mxu0 0.0
        %v485 = vand.u32 %v251, 4294901760
        %v486 = vsub.f32 %v251, %v485
        %487 = vmatpush1.msra.mxu0 %v486
        %488 = vmatprep.subr.mxu0 0.0
        %489 = vmatpush1.msra.mxu0 0.0
        %490 = vmatprep.subr.mxu0 0.0
        %491 = vmatpush1.msra.mxu0 0.0
        %492 = vmatprep.subr.mxu0 0.0
        %493 = vmatpush1.msra.mxu0 0.0
        %494 = vmatprep.subr.mxu0 0.0
        %495 = vmatpush1.msra.mxu0 0.0
        %496 = vmatprep.subr.mxu0 0.0
        %497 = vmatpush1.msra.mxu0 0.0
        %498 = vmatprep.subr.mxu0 0.0
        %499 = vmatpush1.msra.mxu0 0.0
        %500 = vmatprep.subr.mxu0 0.0
        %501 = vmatpush1.msra.mxu0 0.0
        %502 = vmatprep.subr.mxu0 0.0
        %503 = vmatpush1.msra.mxu0 0.0
        %504 = vmatprep.subr.mxu0 0.0
        %505 = vmatpush1.msra.mxu0 0.0
        %506 = vmatprep.subr.mxu0 0.0
        %507 = vmatpush1.msra.mxu0 0.0
        %508 = vmatprep.subr.mxu0 0.0
        %509 = vmatpush1.msra.mxu0 0.0
        %510 = vmatprep.subr.mxu0 0.0
        %511 = vmatpush1.msra.mxu0 0.0
        %512 = vmatprep.subr.mxu0 0.0
        %513 = vmatpush1.msra.mxu0 0.0
        %514 = vmatprep.subr.mxu0 0.0
        %515 = vmatpush1.msra.mxu0 0.0
        %516 = vmatprep.subr.mxu0 0.0
        %517 = vmatpush1.msra.mxu0 0.0
        %518 = vmatprep.subr.mxu0 0.0
        %519 = vmatpush1.msra.mxu0 0.0
        %520 = vmatprep.subr.mxu0 0.0
        %521 = vmatpush1.msra.mxu0 0.0
        %522 = vmatprep.subr.mxu0 0.0
        %523 = vmatpush1.msra.mxu0 0.0
        %524 = vmatprep.subr.mxu0 0.0
        %525 = vmatpush1.msra.mxu0 0.0
        %526 = vmatprep.subr.mxu0 0.0
        %527 = vmatpush1.msra.mxu0 0.0
        %528 = vmatprep.subr.mxu0 0.0
        %529 = vmatpush1.msra.mxu0 0.0
        %530 = vmatprep.subr.mxu0 0.0
        %531 = vmatpush1.msra.mxu0 0.0
        %532 = vmatprep.subr.mxu0 0.0
        %533 = vmatpush1.msra.mxu0 0.0
        %534 = vmatprep.subr.mxu0 0.0
        %535 = vmatpush1.msra.mxu0 0.0
        %536 = vmatprep.subr.mxu0 0.0
        %537 = vmatpush1.msra.mxu0 0.0
        %538 = vmatprep.subr.mxu0 0.0
        %539 = vmatpush1.msra.mxu0 0.0
        %540 = vmatprep.subr.mxu0 0.0
        %541 = vmatpush1.msra.mxu0 0.0
        %542 = vmatprep.subr.mxu0 0.0
        %543 = vmatpush1.msra.mxu0 0.0
        %544 = vmatprep.subr.mxu0 0.0
        %545 = vmatpush1.msra.mxu0 0.0
        %546 = vmatprep.mubr.f32.mxu0 0.0
        %v547 = vand.u32 %v272, 4294901760
        %v548 = vsub.f32 %v272, %v547
        %549 = vmatmul.mubr.f32.gmra.mrb[0].mxu0 %v548
        %v550 = vpop.f32.mrb[0].mxu0
        %v551 = vadd.f32 %v461, %v550
        %v552 = vpop.f32.mrb[0].mxu0
        %553 = vmatprep.mubr.f32.mxu0 0.0
        %v554 = vand.u32 %v275, 4294901760
        %v555 = vsub.f32 %v275, %v554
        %556 = vmatmul.mubr.f32.gmra.mrb[0].mxu0 %v555
        %v557 = vpop.f32.mrb[0].mxu0
        %v558 = vadd.f32 %v467, %v557
        %v559 = vpop.f32.mrb[0].mxu0
        %560 = vmatprep.mubr.f32.mxu0 0.0
        %v561 = vand.u32 %v278, 4294901760
        %v562 = vsub.f32 %v278, %v561
        %563 = vmatmul.mubr.f32.gmra.mrb[0].mxu0 %v562
        %v564 = vpop.f32.mrb[0].mxu0
        %v565 = vadd.f32 %v473, %v564
        %v566 = vpop.f32.mrb[0].mxu0
        %567 = vdwg.mxu0
        %568 = vmatprep.subr.mxu0 0.0
        %v569 = vand.u32 %v249, 4294901760
        %570 = vmatpush1.msra.mxu0 %v569
        %571 = vmatprep.subr.mxu0 0.0
        %v572 = vand.u32 %v250, 4294901760
        %573 = vmatpush1.msra.mxu0 %v572
        %574 = vmatprep.subr.mxu0 0.0
        %v575 = vand.u32 %v251, 4294901760
        %576 = vmatpush1.msra.mxu0 %v575
        %577 = vmatprep.subr.mxu0 0.0
        %578 = vmatpush1.msra.mxu0 0.0
        %579 = vmatprep.subr.mxu0 0.0
        %580 = vmatpush1.msra.mxu0 0.0
        %581 = vmatprep.subr.mxu0 0.0
        %582 = vmatpush1.msra.mxu0 0.0
        %583 = vmatprep.subr.mxu0 0.0
        %584 = vmatpush1.msra.mxu0 0.0
        %585 = vmatprep.subr.mxu0 0.0
        %586 = vmatpush1.msra.mxu0 0.0
        %587 = vmatprep.subr.mxu0 0.0
        %588 = vmatpush1.msra.mxu0 0.0
        %589 = vmatprep.subr.mxu0 0.0
        %590 = vmatpush1.msra.mxu0 0.0
        %591 = vmatprep.subr.mxu0 0.0
        %592 = vmatpush1.msra.mxu0 0.0
        %593 = vmatprep.subr.mxu0 0.0
        %594 = vmatpush1.msra.mxu0 0.0
        %595 = vmatprep.subr.mxu0 0.0
        %596 = vmatpush1.msra.mxu0 0.0
        %597 = vmatprep.subr.mxu0 0.0
        %598 = vmatpush1.msra.mxu0 0.0
        %599 = vmatprep.subr.mxu0 0.0
        %600 = vmatpush1.msra.mxu0 0.0
        %601 = vmatprep.subr.mxu0 0.0
        %602 = vmatpush1.msra.mxu0 0.0
        %603 = vmatprep.subr.mxu0 0.0
        %604 = vmatpush1.msra.mxu0 0.0
        %605 = vmatprep.subr.mxu0 0.0
        %606 = vmatpush1.msra.mxu0 0.0
        %607 = vmatprep.subr.mxu0 0.0
        %608 = vmatpush1.msra.mxu0 0.0
        %609 = vmatprep.subr.mxu0 0.0
        %610 = vmatpush1.msra.mxu0 0.0
        %611 = vmatprep.subr.mxu0 0.0
        %612 = vmatpush1.msra.mxu0 0.0
        %613 = vmatprep.subr.mxu0 0.0
        %614 = vmatpush1.msra.mxu0 0.0
        %615 = vmatprep.subr.mxu0 0.0
        %616 = vmatpush1.msra.mxu0 0.0
        %617 = vmatprep.subr.mxu0 0.0
        %618 = vmatpush1.msra.mxu0 0.0
        %619 = vmatprep.subr.mxu0 0.0
        %620 = vmatpush1.msra.mxu0 0.0
        %621 = vmatprep.subr.mxu0 0.0
        %622 = vmatpush1.msra.mxu0 0.0
        %623 = vmatprep.subr.mxu0 0.0
        %624 = vmatpush1.msra.mxu0 0.0
        %625 = vmatprep.subr.mxu0 0.0
        %626 = vmatpush1.msra.mxu0 0.0
        %627 = vmatprep.subr.mxu0 0.0
        %628 = vmatpush1.msra.mxu0 0.0
        %629 = vmatprep.subr.mxu0 0.0
        %630 = vmatpush1.msra.mxu0 0.0
        %631 = vmatprep.subr.mxu0 0.0
        %632 = vmatpush1.msra.mxu0 0.0
        %633 = vmatprep.subr.mxu0 0.0
        %634 = vmatpush1.msra.mxu0 0.0
        %635 = vmatprep.mubr.f32.mxu0 0.0
        %v636 = vand.u32 %v272, 4294901760
        %v637 = vsub.f32 %v272, %v636
        %v638 = vand.u32 %v637, 4294901760
        %639 = vmatmul.mubr.f32.gmra.mrb[0].mxu0 %v638
        %v640 = vpop.f32.mrb[0].mxu0
        %v641 = vadd.f32 %v551, %v640
        %v642 = vpop.f32.mrb[0].mxu0
        %643 = vmatprep.mubr.f32.mxu0 0.0
        %v644 = vand.u32 %v275, 4294901760
        %v645 = vsub.f32 %v275, %v644
        %v646 = vand.u32 %v645, 4294901760
        %647 = vmatmul.mubr.f32.gmra.mrb[0].mxu0 %v646
        %v648 = vpop.f32.mrb[0].mxu0
        %v649 = vadd.f32 %v558, %v648
        %v650 = vpop.f32.mrb[0].mxu0
        %651 = vmatprep.mubr.f32.mxu0 0.0
        %v652 = vand.u32 %v278, 4294901760
        %v653 = vsub.f32 %v278, %v652
        %v654 = vand.u32 %v653, 4294901760
        %655 = vmatmul.mubr.f32.gmra.mrb[0].mxu0 %v654
        %v656 = vpop.f32.mrb[0].mxu0
        %v657 = vadd.f32 %v565, %v656
        %v658 = vpop.f32.mrb[0].mxu0
        %659 = vdwg.mxu0
        %660 = vmatprep.subr.mxu0 0.0
        %v661 = vand.u32 %v249, 4294901760
        %v662 = vsub.f32 %v249, %v661
        %v663 = vand.u32 %v662, 4294901760
        %664 = vmatpush1.msra.mxu0 %v663
        %665 = vmatprep.subr.mxu0 0.0
        %v666 = vand.u32 %v250, 4294901760
        %v667 = vsub.f32 %v250, %v666
        %v668 = vand.u32 %v667, 4294901760
        %669 = vmatpush1.msra.mxu0 %v668
        %670 = vmatprep.subr.mxu0 0.0
        %v671 = vand.u32 %v251, 4294901760
        %v672 = vsub.f32 %v251, %v671
        %v673 = vand.u32 %v672, 4294901760
        %674 = vmatpush1.msra.mxu0 %v673
        %675 = vmatprep.subr.mxu0 0.0
        %676 = vmatpush1.msra.mxu0 0.0
        %677 = vmatprep.subr.mxu0 0.0
        %678 = vmatpush1.msra.mxu0 0.0
        %679 = vmatprep.subr.mxu0 0.0
        %680 = vmatpush1.msra.mxu0 0.0
        %681 = vmatprep.subr.mxu0 0.0
        %682 = vmatpush1.msra.mxu0 0.0
        %683 = vmatprep.subr.mxu0 0.0
        %684 = vmatpush1.msra.mxu0 0.0
        %685 = vmatprep.subr.mxu0 0.0
        %686 = vmatpush1.msra.mxu0 0.0
        %687 = vmatprep.subr.mxu0 0.0
        %688 = vmatpush1.msra.mxu0 0.0
        %689 = vmatprep.subr.mxu0 0.0
        %690 = vmatpush1.msra.mxu0 0.0
        %691 = vmatprep.subr.mxu0 0.0
        %692 = vmatpush1.msra.mxu0 0.0
        %693 = vmatprep.subr.mxu0 0.0
        %694 = vmatpush1.msra.mxu0 0.0
        %695 = vmatprep.subr.mxu0 0.0
        %696 = vmatpush1.msra.mxu0 0.0
        %697 = vmatprep.subr.mxu0 0.0
        %698 = vmatpush1.msra.mxu0 0.0
        %699 = vmatprep.subr.mxu0 0.0
        %700 = vmatpush1.msra.mxu0 0.0
        %701 = vmatprep.subr.mxu0 0.0
        %702 = vmatpush1.msra.mxu0 0.0
        %703 = vmatprep.subr.mxu0 0.0
        %704 = vmatpush1.msra.mxu0 0.0
        %705 = vmatprep.subr.mxu0 0.0
        %706 = vmatpush1.msra.mxu0 0.0
        %707 = vmatprep.subr.mxu0 0.0
        %708 = vmatpush1.msra.mxu0 0.0
        %709 = vmatprep.subr.mxu0 0.0
        %710 = vmatpush1.msra.mxu0 0.0
        %711 = vmatprep.subr.mxu0 0.0
        %712 = vmatpush1.msra.mxu0 0.0
        %713 = vmatprep.subr.mxu0 0.0
        %714 = vmatpush1.msra.mxu0 0.0
        %715 = vmatprep.subr.mxu0 0.0
        %716 = vmatpush1.msra.mxu0 0.0
        %717 = vmatprep.subr.mxu0 0.0
        %718 = vmatpush1.msra.mxu0 0.0
        %719 = vmatprep.subr.mxu0 0.0
        %720 = vmatpush1.msra.mxu0 0.0
        %721 = vmatprep.subr.mxu0 0.0
        %722 = vmatpush1.msra.mxu0 0.0
        %723 = vmatprep.subr.mxu0 0.0
        %724 = vmatpush1.msra.mxu0 0.0
        %725 = vmatprep.subr.mxu0 0.0
        %726 = vmatpush1.msra.mxu0 0.0
        %727 = vmatprep.subr.mxu0 0.0
        %728 = vmatpush1.msra.mxu0 0.0
        %729 = vmatprep.subr.mxu0 0.0
        %730 = vmatpush1.msra.mxu0 0.0
        %731 = vmatprep.subr.mxu0 0.0
        %732 = vmatpush1.msra.mxu0 0.0
        %733 = vmatprep.mubr.f32.mxu0 0.0
        %v734 = vand.u32 %v272, 4294901760
        %735 = vmatmul.mubr.f32.gmra.mrb[0].mxu0 %v734
        %v736 = vpop.f32.mrb[0].mxu0
        %v737 = vadd.f32 %v641, %v736
        %v738 = vpop.f32.mrb[0].mxu0
        %739 = vmatprep.mubr.f32.mxu0 0.0
        %v740 = vand.u32 %v275, 4294901760
        %741 = vmatmul.mubr.f32.gmra.mrb[0].mxu0 %v740
        %v742 = vpop.f32.mrb[0].mxu0
        %v743 = vadd.f32 %v649, %v742
        %v744 = vpop.f32.mrb[0].mxu0
        %745 = vmatprep.mubr.f32.mxu0 0.0
        %v746 = vand.u32 %v278, 4294901760
        %747 = vmatmul.mubr.f32.gmra.mrb[0].mxu0 %v746
        %v748 = vpop.f32.mrb[0].mxu0
        %v749 = vadd.f32 %v657, %v748
        %v750 = vpop.f32.mrb[0].mxu0
        %751 = vdwg.mxu0
        %752 = vmatprep.subr.mxu0 0.0
        %v753 = vand.u32 %v249, 4294901760
        %754 = vmatpush1.msra.mxu0 %v753
        %755 = vmatprep.subr.mxu0 0.0
        %v756 = vand.u32 %v250, 4294901760
        %757 = vmatpush1.msra.mxu0 %v756
        %758 = vmatprep.subr.mxu0 0.0
        %v759 = vand.u32 %v251, 4294901760
        %760 = vmatpush1.msra.mxu0 %v759
        %761 = vmatprep.subr.mxu0 0.0
        %762 = vmatpush1.msra.mxu0 0.0
        %763 = vmatprep.subr.mxu0 0.0
        %764 = vmatpush1.msra.mxu0 0.0
        %765 = vmatprep.subr.mxu0 0.0
        %766 = vmatpush1.msra.mxu0 0.0
        %767 = vmatprep.subr.mxu0 0.0
        %768 = vmatpush1.msra.mxu0 0.0
        %769 = vmatprep.subr.mxu0 0.0
        %770 = vmatpush1.msra.mxu0 0.0
        %771 = vmatprep.subr.mxu0 0.0
        %772 = vmatpush1.msra.mxu0 0.0
        %773 = vmatprep.subr.mxu0 0.0
        %774 = vmatpush1.msra.mxu0 0.0
        %775 = vmatprep.subr.mxu0 0.0
        %776 = vmatpush1.msra.mxu0 0.0
        %777 = vmatprep.subr.mxu0 0.0
        %778 = vmatpush1.msra.mxu0 0.0
        %779 = vmatprep.subr.mxu0 0.0
        %780 = vmatpush1.msra.mxu0 0.0
        %781 = vmatprep.subr.mxu0 0.0
        %782 = vmatpush1.msra.mxu0 0.0
        %783 = vmatprep.subr.mxu0 0.0
        %784 = vmatpush1.msra.mxu0 0.0
        %785 = vmatprep.subr.mxu0 0.0
        %786 = vmatpush1.msra.mxu0 0.0
        %787 = vmatprep.subr.mxu0 0.0
        %788 = vmatpush1.msra.mxu0 0.0
        %789 = vmatprep.subr.mxu0 0.0
        %790 = vmatpush1.msra.mxu0 0.0
        %791 = vmatprep.subr.mxu0 0.0
        %792 = vmatpush1.msra.mxu0 0.0
        %793 = vmatprep.subr.mxu0 0.0
        %794 = vmatpush1.msra.mxu0 0.0
        %795 = vmatprep.subr.mxu0 0.0
        %796 = vmatpush1.msra.mxu0 0.0
        %797 = vmatprep.subr.mxu0 0.0
        %798 = vmatpush1.msra.mxu0 0.0
        %799 = vmatprep.subr.mxu0 0.0
        %800 = vmatpush1.msra.mxu0 0.0
        %801 = vmatprep.subr.mxu0 0.0
        %802 = vmatpush1.msra.mxu0 0.0
        %803 = vmatprep.subr.mxu0 0.0
        %804 = vmatpush1.msra.mxu0 0.0
        %805 = vmatprep.subr.mxu0 0.0
        %806 = vmatpush1.msra.mxu0 0.0
        %807 = vmatprep.subr.mxu0 0.0
        %808 = vmatpush1.msra.mxu0 0.0
        %809 = vmatprep.subr.mxu0 0.0
        %810 = vmatpush1.msra.mxu0 0.0
        %811 = vmatprep.subr.mxu0 0.0
        %812 = vmatpush1.msra.mxu0 0.0
        %813 = vmatprep.subr.mxu0 0.0
        %814 = vmatpush1.msra.mxu0 0.0
        %815 = vmatprep.subr.mxu0 0.0
        %816 = vmatpush1.msra.mxu0 0.0
        %817 = vmatprep.subr.mxu0 0.0
        %818 = vmatpush1.msra.mxu0 0.0
        %819 = vmatprep.mubr.f32.mxu0 0.0
        %v820 = vand.u32 %v272, 4294901760
        %821 = vmatmul.mubr.f32.gmra.mrb[0].mxu0 %v820
        %v822 = vpop.f32.mrb[0].mxu0
        %v823 = vadd.f32 %v737, %v822
        %v824 = vpop.f32.mrb[0].mxu0
        %825 = vmatprep.mubr.f32.mxu0 0.0
        %v826 = vand.u32 %v275, 4294901760
        %827 = vmatmul.mubr.f32.gmra.mrb[0].mxu0 %v826
        %v828 = vpop.f32.mrb[0].mxu0
        %v829 = vadd.f32 %v743, %v828
        %v830 = vpop.f32.mrb[0].mxu0
        %831 = vmatprep.mubr.f32.mxu0 0.0
        %v832 = vand.u32 %v278, 4294901760
        %833 = vmatmul.mubr.f32.gmra.mrb[0].mxu0 %v832
        %v834 = vpop.f32.mrb[0].mxu0
        %v835 = vadd.f32 %v749, %v834
        %v836 = vpop.f32.mrb[0].mxu0
        %837 = vdwg.mxu0
        %v838 = vtanh.pop %v823
        %v839 = vtanh.pop %v829
        %v840 = vtanh.pop %v835
        %842 = vset.pattern.permute.xlu0 0
        %843 = vperm.xlu0 %842, %v203
        %v844 = vpop.permute.xlu0 %843
        %847 = vset.pattern.permute.xlu0 0
        %848 = vperm.xlu0 %847, %v204
        %v849 = vpop.permute.xlu0 %848
        %852 = vset.pattern.permute.xlu0 0
        %853 = vperm.xlu0 %852, %v205
        %v854 = vpop.permute.xlu0 %853
        %v856 = vmul.f32 %v844, %v838
        %v857 = vmul.f32 %v849, %v839
        %v858 = vmul.f32 %v854, %v840
        %v859 = vadd.f32 %v856, %v857
        %v860 = vadd.f32 %v859, %v858
        %v861 = vrot.slane %v860, 4
        %v862 = vadd.f32 %v860, %v861
        %v863 = vrot.slane %v862, 2
        %v864 = vadd.f32 %v862, %v863
        %v865 = vrot.slane %v864, 1
        %v866 = vadd.f32 %v864, %v865
        %v867 = vstv %s206
        %v868 = vadd.f32 %v866, %v867
        %869 = vst [vmem:[%s186] sm:$0x1] %v868
        %s870 = sand.u32 %s116, 1
        %s871 = scalar_lea.sflag [#allocation4], %s870
        %s872 = sand.u32 %s116, 1
        %s873 = scalar_lea.vmem [#allocation3], %s872
        // Predicated region
        $region37: #{tpu_custom_call.1} parent=35 // pred_check
          %p874 = pneg %p126
        $region38: #{tpu_custom_call.1} parent=35 // pred_check_branch
          %876 = sbr.rel (%p874) target = $region40
        $region39: #{tpu_custom_call.1} parent=35 // pred_region
          %s878 = ssub.s32 16, 16
          %879 = vsyncadd %s871, %s878
          %s880 = smul.addr %s19, 16
          %s881 = scalar_lea.hbm %s4, %s880
          %s883 = sshll.u32 %s873, 4
          %s884 = int_to_ptr.vmem [resolvable:$true] %s883
          %886 = dma.vmem_to_hbm [thread:$0]  %s884, 16, %s881, %s871
        $region40: #{tpu_custom_call.1} parent=35 // pred_fallthru
          _
      $region36: #{tpu_custom_call.1} parent=5 // pred_fallthru
        _
      %p887 = scmp.le.s32.totalorder 2, %s14
      // Predicated region
      $region41: #{tpu_custom_call.1} parent=5 // pred_check
        %p888 = pneg %p887
      $region42: #{tpu_custom_call.1} parent=5 // pred_check_branch
        %890 = sbr.rel (%p888) target = $region44
      $region43: #{tpu_custom_call.1} parent=5 // pred_region
        %s891 = ssub.s32 %s14, 2
        // Predicated region
        $region45: #{tpu_custom_call.1} parent=43 // pred_check
          %p892 = pneg %p132
        $region46: #{tpu_custom_call.1} parent=43 // pred_check_branch
          %894 = sbr.rel (%p892) target = $region48
        $region47: #{tpu_custom_call.1} parent=43 // pred_region
          %s895 = sand.u32 %s117, 1
          %s896 = scalar_lea.sflag [#allocation4], %s895
          %s897 = sand.u32 %s117, 1
          %s898 = scalar_lea.vmem [#allocation3], %s897
          %899 = dma.done %s896, 16
        $region48: #{tpu_custom_call.1} parent=43 // pred_fallthru
          _
      $region44: #{tpu_custom_call.1} parent=5 // pred_fallthru
        _
    $region6: #{tpu_custom_call.1} parent=1 // loop_footer
      %s18 = sadd.s32 1, %s14
    $region7: #{tpu_custom_call.1} parent=1 // loop_footer_branch
      %13 = sbr.rel target = $region3
    $region8: #{tpu_custom_call.1} parent=1 // loop_exit
      _
    %900 = vsyncpa [#allocation4], 1
    %s901 = scalar_lea.sflag [#allocation4], 1
    %902 = vsyncpa %s901, 1

</llo_original>
